<compile_context>
chip_gen: v5e
topology: v5e:2x2
jax: 0.10.0
libtpu: 0.0.40
codegen_flags: <defaults>
</compile_context>

<pallas_src>
import jax
import jax.numpy as jnp
from jax import lax
from jax.experimental import pallas as pl
from jax.experimental.pallas import tpu as pltpu


def tatt1_kernel(seq_ref, wfold_ref, exp_ref, b_ref, vbd_ref, out_ref):
    # seq_ref : (B*T, C*N)   lane-dense (C*N = 128 on lanes)
    # wfold   : (C*N, C)     w1[c]*W[n,c'] at row c*N+n
    # exp     : (C, C*N)     (c'==c)*w2[n] at column c*N+n
    # b       : (B*T, T)     bias tiled over batch
    # vbd     : (B*T, B*T)   block-diag(v, ..., v)
    # out     : (B*T, T)
    bt, _ = seq_ref.shape
    t = out_ref.shape[1]
    b = bt // t

    seq = seq_ref[...]                                                       # (B*T, K)

    # m1[bt, c'] = sum_{c,n} w1[c] * W[n, c'] * seq[b, c, n, t]   (conv1 folded in)
    m1 = jnp.dot(seq, wfold_ref[...], preferred_element_type=jnp.float32)    # (B*T, C)
    # A[bt, c*N+n] = m1[bt, c] * w2[n]   (conv2 folded in via expansion matrix)
    a = jnp.dot(m1, exp_ref[...], preferred_element_type=jnp.float32)        # (B*T, K)

    # m2[b][t, u] = sum_k A[b*T+t, k] * seq[b*T+u, k]   (batch-local contraction)
    blocks = []
    for bi in range(b):                      # static, tiny: one MXU pass per batch
        lhs = a[bi * t:(bi + 1) * t, :]
        rhs = seq[bi * t:(bi + 1) * t, :]
        blocks.append(lax.dot_general(lhs, rhs, (((1,), (1,)), ((), ())),
                                      preferred_element_type=jnp.float32))
    m2 = jnp.concatenate(blocks, axis=0)                                     # (B*T, T)

    lg = 1.0 / (1.0 + jnp.exp(-(m2 + b_ref[...])))                           # sigmoid
    # L[b] = v @ lg[b] for all batches at once via the block-diagonal v.
    big_l = jnp.dot(vbd_ref[...], lg, preferred_element_type=jnp.float32)    # (B*T, T)

    # BatchNorm1d, training-mode batch statistics (biased var), gamma=1, beta=0.
    cnt = float(bt)
    mean = jnp.sum(big_l, axis=0, keepdims=True) / cnt                       # (1, T)
    d = big_l - mean
    var = jnp.sum(d * d, axis=0, keepdims=True) / cnt                        # (1, T)
    ln = d * lax.rsqrt(var + 1e-5)

    # Row-wise softmax.
    mmax = jnp.max(ln, axis=-1, keepdims=True)
    e = jnp.exp(ln - mmax)
    out_ref[...] = (e / jnp.sum(e, axis=-1, keepdims=True)).astype(out_ref.dtype)


@jax.jit
def tatt_1_forward(seq, conv1_w, conv2_w, w, b, v):
    # seq: (B, c_in, num_nodes, tem_size)
    B, C, N, T = seq.shape
    K = C * N

    f32 = jnp.float32
    seq32 = seq.astype(f32)
    # Lane-dense operand: (B*T, C*N) with the K=128 contraction axis on lanes.
    seq_flat = jnp.transpose(seq32, (0, 3, 1, 2)).reshape(B * T, K)
    # Fold conv1 weight into W:  Wfold[c*N+n, c'] = w1[c] * W[n, c'].
    wfold = (conv1_w.astype(f32)[:, None, None] * w.astype(f32)[None, :, :]).reshape(K, C)
    # Expansion matrix for conv2:  E[c', c*N+n] = (c'==c) * w2[n].
    exp_mat = (jnp.eye(C, dtype=f32)[:, :, None] *
               conv2_w.astype(f32)[None, None, :]).reshape(C, K)
    b_tiled = jnp.tile(b.astype(f32), (B, 1))                         # (B*T, T)
    v_bd = jnp.kron(jnp.eye(B, dtype=f32), v.astype(f32))             # (B*T, B*T)

    vmem = pl.BlockSpec(memory_space=pltpu.MemorySpace.VMEM)
    out = pl.pallas_call(
        tatt1_kernel,
        out_shape=jax.ShapeDtypeStruct((B * T, T), f32),
        in_specs=[vmem, vmem, vmem, vmem, vmem],
        out_specs=vmem,
    )(seq_flat, wfold, exp_mat, b_tiled, v_bd)
    return out.reshape(B, T, T)


def reference(seq, conv1_w, conv2_w, w, b, v, eps=1e-5):
    # Pure-JAX mirror of the PyTorch TATT_1 forward (training-mode BN, gamma=1, beta=0).
    f1 = jnp.einsum('bcnt,c->btn', seq, conv1_w)
    f2 = jnp.einsum('bcnt,n->bct', seq, conv2_w)
    m1 = jnp.einsum('btn,nc->btc', f1, w)
    m2 = jnp.einsum('btc,bcu->btu', m1, f2)
    logits = jax.nn.sigmoid(m2 + b[None])
    L = jnp.einsum('ij,bjk->bik', v, logits)
    mean = jnp.mean(L, axis=(0, 1), keepdims=True)
    var = jnp.mean((L - mean) ** 2, axis=(0, 1), keepdims=True)
    Ln = (L - mean) / jnp.sqrt(var + eps)
    return jax.nn.softmax(Ln, axis=-1)


if __name__ == "__main__":
    B, c_in, num_nodes, tem_size = 2, 8, 16, 16   # c_in * num_nodes = 128 (one lane tile)

    key = jax.random.PRNGKey(0)
    k1, k2, k3, k4, k5 = jax.random.split(key, 5)
    conv1_w = jax.random.normal(k1, (c_in,), jnp.float32) * 0.5
    conv2_w = jax.random.normal(k2, (num_nodes,), jnp.float32) * 0.3
    lim_w = (6.0 / (num_nodes + c_in)) ** 0.5
    w = jax.random.uniform(k3, (num_nodes, c_in), jnp.float32, -lim_w, lim_w)
    b = jnp.zeros((tem_size, tem_size), jnp.float32)
    lim_v = (6.0 / (2 * tem_size)) ** 0.5
    v = jax.random.uniform(k4, (tem_size, tem_size), jnp.float32, -lim_v, lim_v)

    seq = jax.random.normal(k5, (B, c_in, num_nodes, tem_size), jnp.float32)

    out = jax.block_until_ready(tatt_1_forward(seq, conv1_w, conv2_w, w, b, v))
    ref = jax.block_until_ready(reference(seq, conv1_w, conv2_w, w, b, v))

    assert out.shape == (B, tem_size, tem_size), out.shape
    assert bool(jnp.all(jnp.isfinite(out)))
    row_sums = jnp.sum(out, axis=-1)
    assert bool(jnp.allclose(row_sums, 1.0, atol=1e-4)), "softmax rows must sum to 1"
    max_err = float(jnp.max(jnp.abs(out - ref)))
    assert max_err < 5e-3, f"mismatch vs reference: {max_err}"

    print("KERNEL_OK")
</pallas_src>

<mosaic_0001>
module attributes {stable_mosaic.version = 11 : i64} {
  func.func @tatt1_kernel(%arg0: memref<32x128xf32, #tpu.memory_space<vmem>>, %arg1: memref<128x8xf32, #tpu.memory_space<vmem>>, %arg2: memref<8x128xf32, #tpu.memory_space<vmem>>, %arg3: memref<32x16xf32, #tpu.memory_space<vmem>>, %arg4: memref<32x32xf32, #tpu.memory_space<vmem>>, %arg5: memref<32x16xf32, #tpu.memory_space<vmem>>) attributes {dimension_semantics = [], scalar_prefetch = 0 : i64, scratch_operands = 0 : i64, tpu.core_type = #tpu.core_type<tc>} {
    %c0 = arith.constant 0 : index
    %c0_0 = arith.constant 0 : index
    %0 = vector.load %arg0[%c0, %c0_0] : memref<32x128xf32, #tpu.memory_space<vmem>>, vector<32x128xf32>
    %c0_1 = arith.constant 0 : index
    %c0_2 = arith.constant 0 : index
    %1 = vector.load %arg1[%c0_1, %c0_2] : memref<128x8xf32, #tpu.memory_space<vmem>>, vector<128x8xf32>
    %cst = arith.constant dense<0.000000e+00> : vector<32x8xf32>
    %2 = tpu.matmul %0, %1, %cst {dimension_numbers = #tpu.dot_dimension_numbers<[1], [0], [0], [1], [0, 0, 1, 1], [], []>} : vector<32x128xf32>, vector<128x8xf32>, vector<32x8xf32> -> vector<32x8xf32>
    %c0_3 = arith.constant 0 : index
    %c0_4 = arith.constant 0 : index
    %3 = vector.load %arg2[%c0_3, %c0_4] : memref<8x128xf32, #tpu.memory_space<vmem>>, vector<8x128xf32>
    %cst_5 = arith.constant dense<0.000000e+00> : vector<32x128xf32>
    %4 = tpu.matmul %2, %3, %cst_5 {dimension_numbers = #tpu.dot_dimension_numbers<[1], [0], [0], [1], [0, 0, 1, 1], [], []>} : vector<32x8xf32>, vector<8x128xf32>, vector<32x128xf32> -> vector<32x128xf32>
    %5 = vector.extract_strided_slice %4 {offsets = [0, 0], sizes = [16, 128], strides = [1, 1]} : vector<32x128xf32> to vector<16x128xf32>
    %6 = vector.extract_strided_slice %0 {offsets = [0, 0], sizes = [16, 128], strides = [1, 1]} : vector<32x128xf32> to vector<16x128xf32>
    %cst_6 = arith.constant dense<0.000000e+00> : vector<16x16xf32>
    %7 = tpu.matmul %5, %6, %cst_6 {dimension_numbers = #tpu.dot_dimension_numbers<[1], [1], [0], [0], [0, 0, 1, 0], [], []>} : vector<16x128xf32>, vector<16x128xf32>, vector<16x16xf32> -> vector<16x16xf32>
    %8 = vector.extract_strided_slice %4 {offsets = [16, 0], sizes = [16, 128], strides = [1, 1]} : vector<32x128xf32> to vector<16x128xf32>
    %9 = vector.extract_strided_slice %0 {offsets = [16, 0], sizes = [16, 128], strides = [1, 1]} : vector<32x128xf32> to vector<16x128xf32>
    %cst_7 = arith.constant dense<0.000000e+00> : vector<16x16xf32>
    %10 = tpu.matmul %8, %9, %cst_7 {dimension_numbers = #tpu.dot_dimension_numbers<[1], [1], [0], [0], [0, 0, 1, 0], [], []>} : vector<16x128xf32>, vector<16x128xf32>, vector<16x16xf32> -> vector<16x16xf32>
    %11 = tpu.concatenate %7, %10 in 0 : vector<16x16xf32>, vector<16x16xf32> -> vector<32x16xf32>
    %c0_8 = arith.constant 0 : index
    %c0_9 = arith.constant 0 : index
    %12 = vector.load %arg3[%c0_8, %c0_9] : memref<32x16xf32, #tpu.memory_space<vmem>>, vector<32x16xf32>
    %13 = arith.addf %11, %12 : vector<32x16xf32>
    %cst_10 = arith.constant 0.000000e+00 : f32
    %14 = vector.broadcast %cst_10 : f32 to vector<32x16xf32>
    %15 = arith.subf %14, %13 : vector<32x16xf32>
    %16 = math.exp %15 : vector<32x16xf32>
    %cst_11 = arith.constant 1.000000e+00 : f32
    %17 = vector.broadcast %cst_11 : f32 to vector<32x16xf32>
    %18 = arith.addf %17, %16 : vector<32x16xf32>
    %cst_12 = arith.constant 1.000000e+00 : f32
    %19 = vector.broadcast %cst_12 : f32 to vector<32x16xf32>
    %20 = arith.divf %19, %18 : vector<32x16xf32>
    %c0_13 = arith.constant 0 : index
    %c0_14 = arith.constant 0 : index
    %21 = vector.load %arg4[%c0_13, %c0_14] : memref<32x32xf32, #tpu.memory_space<vmem>>, vector<32x32xf32>
    %cst_15 = arith.constant dense<0.000000e+00> : vector<32x16xf32>
    %22 = tpu.matmul %21, %20, %cst_15 {dimension_numbers = #tpu.dot_dimension_numbers<[1], [0], [0], [1], [0, 0, 1, 1], [], []>} : vector<32x32xf32>, vector<32x16xf32>, vector<32x16xf32> -> vector<32x16xf32>
    %cst_16 = arith.constant dense<0.000000e+00> : vector<16xf32>
    %23 = vector.multi_reduction <add>, %22, %cst_16 [0] : vector<32x16xf32> to vector<16xf32>
    %24 = vector.shape_cast %23 : vector<16xf32> to vector<1x16xf32>
    %cst_17 = arith.constant 3.200000e+01 : f32
    %25 = vector.broadcast %cst_17 : f32 to vector<1x16xf32>
    %26 = arith.divf %24, %25 : vector<1x16xf32>
    %27 = vector.broadcast %26 : vector<1x16xf32> to vector<32x16xf32>
    %28 = arith.subf %22, %27 : vector<32x16xf32>
    %29 = arith.mulf %28, %28 : vector<32x16xf32>
    %cst_18 = arith.constant dense<0.000000e+00> : vector<16xf32>
    %30 = vector.multi_reduction <add>, %29, %cst_18 [0] : vector<32x16xf32> to vector<16xf32>
    %31 = vector.shape_cast %30 : vector<16xf32> to vector<1x16xf32>
    %cst_19 = arith.constant 3.200000e+01 : f32
    %32 = vector.broadcast %cst_19 : f32 to vector<1x16xf32>
    %33 = arith.divf %31, %32 : vector<1x16xf32>
    %cst_20 = arith.constant 9.99999974E-6 : f32
    %34 = vector.broadcast %cst_20 : f32 to vector<1x16xf32>
    %35 = arith.addf %33, %34 : vector<1x16xf32>
    %36 = math.rsqrt %35 : vector<1x16xf32>
    %37 = vector.broadcast %36 : vector<1x16xf32> to vector<32x16xf32>
    %38 = arith.mulf %28, %37 : vector<32x16xf32>
    %cst_21 = arith.constant dense<0xFF800000> : vector<32xf32>
    %39 = vector.multi_reduction <maximumf>, %38, %cst_21 [1] : vector<32x16xf32> to vector<32xf32>
    %40 = vector.shape_cast %39 : vector<32xf32> to vector<32x1xf32>
    %41 = vector.broadcast %40 : vector<32x1xf32> to vector<32x16xf32>
    %42 = arith.subf %38, %41 : vector<32x16xf32>
    %43 = math.exp %42 : vector<32x16xf32>
    %cst_22 = arith.constant dense<0.000000e+00> : vector<32xf32>
    %44 = vector.multi_reduction <add>, %43, %cst_22 [1] : vector<32x16xf32> to vector<32xf32>
    %45 = vector.shape_cast %44 : vector<32xf32> to vector<32x1xf32>
    %46 = vector.broadcast %45 : vector<32x1xf32> to vector<32x16xf32>
    %47 = arith.divf %43, %46 : vector<32x16xf32>
    %c0_23 = arith.constant 0 : index
    %c0_24 = arith.constant 0 : index
    %48 = vector.load %arg5[%c0_23, %c0_24] : memref<32x16xf32, #tpu.memory_space<vmem>>, vector<32x16xf32>
    tpu.vector_store %arg5[%c0_23, %c0_24], %47 {strides = array<i32>} : memref<32x16xf32, #tpu.memory_space<vmem>>, vector<32x16xf32>,
    return
  }
}

</mosaic_0001>

<llo_original>
// kernel: tatt_1_forward.1
$region0: #{tatt_1_forward.1}
  #allocation0 [shape = 'u32[]', space=smem, size = 0x4, offset = 0x4, fixed_abs, tag = 'smem constant byte address 0x4 - core index']
  #allocation1 [shape = 'u32[72,128]{1,0:T(1,128)}', space=vmem, size = 0x9000, scoped, tag = 'internal scratch']
  %s0 = inlined_call_operand.vmem [shape: f32[32,128], index: 0, kind: input, shape index: {}]
  %s1 = inlined_call_operand.vmem [shape: f32[128,8], index: 1, kind: input, shape index: {}]
  %s2 = inlined_call_operand.vmem [shape: f32[8,128], index: 2, kind: input, shape index: {}]
  %s3 = inlined_call_operand.vmem [shape: f32[32,16], index: 3, kind: input, shape index: {}]
  %s4 = inlined_call_operand.vmem [shape: f32[32,32], index: 4, kind: input, shape index: {}]
  %s5 = inlined_call_operand.hbm [shape: f32[32,16], index: 5, kind: output, shape index: {}]
  %s6 = sld [smem:[#allocation0]]
  $region30: #{tatt_1_forward.1} parent=0
    _
  %s8 = ssub.s32 1, %s6
  %s9 = scalar_select 0, %s8, %s6
  $region1: #{tatt_1_forward.1} parent=0
    #allocation2 [shape = 'u8[16384]{0}', space=vmem, size = 0x4000, scoped, tag = 'output window, operand 0, single buffered']
    #allocation3 [shape = 's32[1]{0}', space=sflag, size = 0x4, scoped, tag = 'scoped memory for tatt_1_forward.1']
    %10 = vsyncpa [#allocation3], 0
    // Predicated region
    $region2: #{tatt_1_forward.1} parent=1 // pred_check
      _
    $region3: #{tatt_1_forward.1} parent=1 // pred_check_branch
      %12 = sbr.rel (0) target = $region5
    $region4: #{tatt_1_forward.1} parent=1 // pred_region
      _
    $region5: #{tatt_1_forward.1} parent=1 // pred_fallthru
      _
    // Predicated region
    $region6: #{tatt_1_forward.1} parent=1 // pred_check
      _
    $region7: #{tatt_1_forward.1} parent=1 // pred_check_branch
      %14 = sbr.rel (0) target = $region9
    $region8: #{tatt_1_forward.1} parent=1 // pred_region
      _
    $region9: #{tatt_1_forward.1} parent=1 // pred_fallthru
      _
    // Predicated region
    $region10: #{tatt_1_forward.1} parent=1 // pred_check
      _
    $region11: #{tatt_1_forward.1} parent=1 // pred_check_branch
      %16 = sbr.rel (0) target = $region13
    $region12: #{tatt_1_forward.1} parent=1 // pred_region
      _
    $region13: #{tatt_1_forward.1} parent=1 // pred_fallthru
      _
    // Predicated region
    $region14: #{tatt_1_forward.1} parent=1 // pred_check
      _
    $region15: #{tatt_1_forward.1} parent=1 // pred_check_branch
      %18 = sbr.rel (0) target = $region17
    $region16: #{tatt_1_forward.1} parent=1 // pred_region
      _
    $region17: #{tatt_1_forward.1} parent=1 // pred_fallthru
      _
    // Predicated region
    $region18: #{tatt_1_forward.1} parent=1 // pred_check
      _
    $region19: #{tatt_1_forward.1} parent=1 // pred_check_branch
      %20 = sbr.rel (0) target = $region21
    $region20: #{tatt_1_forward.1} parent=1 // pred_region
      _
    $region21: #{tatt_1_forward.1} parent=1 // pred_fallthru
      _
    %v21 = vld [vmem:[%s0] sm:$0xff]
    %v22 = vld [vmem:[%s0 + $0x8] sm:$0xff]
    %v23 = vld [vmem:[%s0 + $0x10] sm:$0xff]
    %v24 = vld [vmem:[%s0 + $0x18] sm:$0xff]
    %v25 = vld [vmem:[%s1] sm:$0xff]
    %v26 = vld [vmem:[%s1 + $0x8] sm:$0xff]
    %v27 = vld [vmem:[%s1 + $0x10] sm:$0xff]
    %v28 = vld [vmem:[%s1 + $0x18] sm:$0xff]
    %v29 = vld [vmem:[%s1 + $0x20] sm:$0xff]
    %v30 = vld [vmem:[%s1 + $0x28] sm:$0xff]
    %v31 = vld [vmem:[%s1 + $0x30] sm:$0xff]
    %v32 = vld [vmem:[%s1 + $0x38] sm:$0xff]
    %v33 = vld [vmem:[%s1 + $0x40] sm:$0xff]
    %v34 = vld [vmem:[%s1 + $0x48] sm:$0xff]
    %v35 = vld [vmem:[%s1 + $0x50] sm:$0xff]
    %v36 = vld [vmem:[%s1 + $0x58] sm:$0xff]
    %v37 = vld [vmem:[%s1 + $0x60] sm:$0xff]
    %v38 = vld [vmem:[%s1 + $0x68] sm:$0xff]
    %v39 = vld [vmem:[%s1 + $0x70] sm:$0xff]
    %v40 = vld [vmem:[%s1 + $0x78] sm:$0xff]
    %41 = vmatpush.msra.mxu0 %v40
    %42 = vmatpush.msra.mxu0 %v39
    %43 = vmatpush.msra.mxu0 %v38
    %44 = vmatpush.msra.mxu0 %v37
    %45 = vmatpush.msra.mxu0 %v36
    %46 = vmatpush.msra.mxu0 %v35
    %47 = vmatpush.msra.mxu0 %v34
    %48 = vmatpush.msra.mxu0 %v33
    %49 = vmatpush.msra.mxu0 %v32
    %50 = vmatpush.msra.mxu0 %v31
    %51 = vmatpush.msra.mxu0 %v30
    %52 = vmatpush.msra.mxu0 %v29
    %53 = vmatpush.msra.mxu0 %v28
    %54 = vmatpush.msra.mxu0 %v27
    %55 = vmatpush.msra.mxu0 %v26
    %56 = vmatpush.msra.mxu0 %v25
    %57 = vmatmul.f32.gmra.mxu0 %v21
    %v58 = vpop.f32.mrf.mxu0
    %v59 = vadd.f32 0.0, %v58
    %60 = vmatmul.f32.gmra.mxu0 %v22
    %v61 = vpop.f32.mrf.mxu0
    %v62 = vadd.f32 0.0, %v61
    %63 = vmatmul.f32.gmra.mxu0 %v23
    %v64 = vpop.f32.mrf.mxu0
    %v65 = vadd.f32 0.0, %v64
    %66 = vmatmul.f32.gmra.mxu0 %v24
    %v67 = vpop.f32.mrf.mxu0
    %v68 = vadd.f32 0.0, %v67
    %69 = vdwg.mxu0
    %v70 = vld [vmem:[%s2] sm:$0xff]
    %vm71 = vcmask 64512
    %v73 = vsel %vm71, %v59, 0
    %v76 = vsel %vm71, %v62, 0
    %v79 = vsel %vm71, %v65, 0
    %v82 = vsel %vm71, %v68, 0
    %84 = vmatpush.msra.mxu0 0.0
    %85 = vmatpush.msra.mxu0 0.0
    %86 = vmatpush.msra.mxu0 0.0
    %87 = vmatpush.msra.mxu0 0.0
    %88 = vmatpush.msra.mxu0 0.0
    %89 = vmatpush.msra.mxu0 0.0
    %90 = vmatpush.msra.mxu0 0.0
    %91 = vmatpush.msra.mxu0 0.0
    %92 = vmatpush.msra.mxu0 0.0
    %93 = vmatpush.msra.mxu0 0.0
    %94 = vmatpush.msra.mxu0 0.0
    %95 = vmatpush.msra.mxu0 0.0
    %96 = vmatpush.msra.mxu0 0.0
    %97 = vmatpush.msra.mxu0 0.0
    %98 = vmatpush.msra.mxu0 0.0
    %99 = vmatpush.msra.mxu0 %v70
    %100 = vmatmul.f32.gmra.mxu0 %v73
    %v101 = vpop.f32.mrf.mxu0
    %v102 = vadd.f32 0.0, %v101
    %103 = vmatmul.f32.gmra.mxu0 %v76
    %v104 = vpop.f32.mrf.mxu0
    %v105 = vadd.f32 0.0, %v104
    %106 = vmatmul.f32.gmra.mxu0 %v79
    %v107 = vpop.f32.mrf.mxu0
    %v108 = vadd.f32 0.0, %v107
    %109 = vmatmul.f32.gmra.mxu0 %v82
    %v110 = vpop.f32.mrf.mxu0
    %v111 = vadd.f32 0.0, %v110
    %112 = vdwg.mxu0
    %113 = vmatpush.xpose.msra.mxu0 0.0
    %114 = vmatpush.xpose.msra.mxu0 0.0
    %115 = vmatpush.xpose.msra.mxu0 0.0
    %116 = vmatpush.xpose.msra.mxu0 0.0
    %117 = vmatpush.xpose.msra.mxu0 0.0
    %118 = vmatpush.xpose.msra.mxu0 0.0
    %119 = vmatpush.xpose.msra.mxu0 0.0
    %120 = vmatpush.xpose.msra.mxu0 0.0
    %121 = vmatpush.xpose.msra.mxu0 0.0
    %122 = vmatpush.xpose.msra.mxu0 0.0
    %123 = vmatpush.xpose.msra.mxu0 0.0
    %124 = vmatpush.xpose.msra.mxu0 0.0
    %125 = vmatpush.xpose.msra.mxu0 0.0
    %126 = vmatpush.xpose.msra.mxu0 0.0
    %127 = vmatpush.xpose.msra.mxu0 %v22
    %128 = vmatpush.xpose.msra.mxu0 %v21
    %129 = vmatmul.f32.gmra.mxu0 %v102
    %v130 = vpop.f32.mrf.mxu0
    %v131 = vadd.f32 0.0, %v130
    %132 = vmatmul.f32.gmra.mxu0 %v105
    %v133 = vpop.f32.mrf.mxu0
    %v134 = vadd.f32 0.0, %v133
    %135 = vdwg.mxu0
    %136 = vmatpush.xpose.msra.mxu0 0.0
    %137 = vmatpush.xpose.msra.mxu0 0.0
    %138 = vmatpush.xpose.msra.mxu0 0.0
    %139 = vmatpush.xpose.msra.mxu0 0.0
    %140 = vmatpush.xpose.msra.mxu0 0.0
    %141 = vmatpush.xpose.msra.mxu0 0.0
    %142 = vmatpush.xpose.msra.mxu0 0.0
    %143 = vmatpush.xpose.msra.mxu0 0.0
    %144 = vmatpush.xpose.msra.mxu0 0.0
    %145 = vmatpush.xpose.msra.mxu0 0.0
    %146 = vmatpush.xpose.msra.mxu0 0.0
    %147 = vmatpush.xpose.msra.mxu0 0.0
    %148 = vmatpush.xpose.msra.mxu0 0.0
    %149 = vmatpush.xpose.msra.mxu0 0.0
    %150 = vmatpush.xpose.msra.mxu0 %v24
    %151 = vmatpush.xpose.msra.mxu0 %v23
    %152 = vmatmul.f32.gmra.mxu0 %v108
    %v153 = vpop.f32.mrf.mxu0
    %v154 = vadd.f32 0.0, %v153
    %155 = vmatmul.f32.gmra.mxu0 %v111
    %v156 = vpop.f32.mrf.mxu0
    %v157 = vadd.f32 0.0, %v156
    %158 = vdwg.mxu0
    %v159 = vld [vmem:[%s3] sm:$0xff]
    %v160 = vld [vmem:[%s3 + $0x8] sm:$0xff]
    %v161 = vld [vmem:[%s3 + $0x10] sm:$0xff]
    %v162 = vld [vmem:[%s3 + $0x18] sm:$0xff]
    %v163 = vadd.f32 %v131, %v159
    %v164 = vadd.f32 %v134, %v160
    %v165 = vadd.f32 %v154, %v161
    %v166 = vadd.f32 %v157, %v162
    %v167 = vsub.f32 0.0, %v163
    %v168 = vsub.f32 0.0, %v164
    %v169 = vsub.f32 0.0, %v165
    %v170 = vsub.f32 0.0, %v166
    %v171 = vmul.f32 %v167, 1.442695
    %v172 = vpow.pop %v171
    %v173 = vmul.f32 %v168, 1.442695
    %v174 = vpow.pop %v173
    %v175 = vmul.f32 %v169, 1.442695
    %v176 = vpow.pop %v175
    %v177 = vmul.f32 %v170, 1.442695
    %v178 = vpow.pop %v177
    %v179 = vadd.f32 %v172, 1.0
    %v180 = vadd.f32 %v174, 1.0
    %v181 = vadd.f32 %v176, 1.0
    %v182 = vadd.f32 %v178, 1.0
    %v183 = vrcp.pop %v179
    %v184 = vmul.f32 %v179, %v183
    %v185 = vsub.f32 1.0, %v184
    %v186 = vmul.f32 %v183, %v185
    %v187 = vadd.f32 %v183, %v186
    %vm188 = vweird.f32 %v179
    %vm189 = vweird.f32 %v183
    %vm190 = vmor %vm188, %vm189
    %v191 = vsel %vm190, %v183, %v187
    %v192 = vand.u32 2147483647, %v179
    %vm193 = vcmp.eq.f32.partialorder %v192, 8.507059e+37
    %v194 = vand.u32 %v179, 2147483648
    %v195 = vor.u32 1.1754944e-38, %v194
    %v196 = vsel %vm193, %v195, %v191
    %v197 = vmul.f32 1.0, %v196
    %v198 = vrcp.pop %v180
    %v199 = vmul.f32 %v180, %v198
    %v200 = vsub.f32 1.0, %v199
    %v201 = vmul.f32 %v198, %v200
    %v202 = vadd.f32 %v198, %v201
    %vm203 = vweird.f32 %v180
    %vm204 = vweird.f32 %v198
    %vm205 = vmor %vm203, %vm204
    %v206 = vsel %vm205, %v198, %v202
    %v207 = vand.u32 2147483647, %v180
    %vm208 = vcmp.eq.f32.partialorder %v207, 8.507059e+37
    %v209 = vand.u32 %v180, 2147483648
    %v210 = vor.u32 1.1754944e-38, %v209
    %v211 = vsel %vm208, %v210, %v206
    %v212 = vmul.f32 1.0, %v211
    %v213 = vrcp.pop %v181
    %v214 = vmul.f32 %v181, %v213
    %v215 = vsub.f32 1.0, %v214
    %v216 = vmul.f32 %v213, %v215
    %v217 = vadd.f32 %v213, %v216
    %vm218 = vweird.f32 %v181
    %vm219 = vweird.f32 %v213
    %vm220 = vmor %vm218, %vm219
    %v221 = vsel %vm220, %v213, %v217
    %v222 = vand.u32 2147483647, %v181
    %vm223 = vcmp.eq.f32.partialorder %v222, 8.507059e+37
    %v224 = vand.u32 %v181, 2147483648
    %v225 = vor.u32 1.1754944e-38, %v224
    %v226 = vsel %vm223, %v225, %v221
    %v227 = vmul.f32 1.0, %v226
    %v228 = vrcp.pop %v182
    %v229 = vmul.f32 %v182, %v228
    %v230 = vsub.f32 1.0, %v229
    %v231 = vmul.f32 %v228, %v230
    %v232 = vadd.f32 %v228, %v231
    %vm233 = vweird.f32 %v182
    %vm234 = vweird.f32 %v228
    %vm235 = vmor %vm233, %vm234
    %v236 = vsel %vm235, %v228, %v232
    %v237 = vand.u32 2147483647, %v182
    %vm238 = vcmp.eq.f32.partialorder %v237, 8.507059e+37
    %v239 = vand.u32 %v182, 2147483648
    %v240 = vor.u32 1.1754944e-38, %v239
    %v241 = vsel %vm238, %v240, %v236
    %v242 = vmul.f32 1.0, %v241
    %v243 = vld [vmem:[%s4] sm:$0xff]
    %v244 = vld [vmem:[%s4 + $0x8] sm:$0xff]
    %v245 = vld [vmem:[%s4 + $0x10] sm:$0xff]
    %v246 = vld [vmem:[%s4 + $0x18] sm:$0xff]
    %vm247 = vcmask 261120
    %v249 = vsel %vm247, %v243, 0
    %v252 = vsel %vm247, %v244, 0
    %v255 = vsel %vm247, %v245, 0
    %v258 = vsel %vm247, %v246, 0
    %260 = vmatpush.msra.mxu0 0.0
    %261 = vmatpush.msra.mxu0 0.0
    %262 = vmatpush.msra.mxu0 0.0
    %263 = vmatpush.msra.mxu0 0.0
    %264 = vmatpush.msra.mxu0 0.0
    %265 = vmatpush.msra.mxu0 0.0
    %266 = vmatpush.msra.mxu0 0.0
    %267 = vmatpush.msra.mxu0 0.0
    %268 = vmatpush.msra.mxu0 0.0
    %269 = vmatpush.msra.mxu0 0.0
    %270 = vmatpush.msra.mxu0 0.0
    %271 = vmatpush.msra.mxu0 0.0
    %272 = vmatpush.msra.mxu0 %v242
    %273 = vmatpush.msra.mxu0 %v227
    %274 = vmatpush.msra.mxu0 %v212
    %275 = vmatpush.msra.mxu0 %v197
    %276 = vmatmul.f32.gmra.mxu0 %v249
    %v277 = vpop.f32.mrf.mxu0
    %v278 = vadd.f32 0.0, %v277
    %279 = vmatmul.f32.gmra.mxu0 %v252
    %v280 = vpop.f32.mrf.mxu0
    %v281 = vadd.f32 0.0, %v280
    %282 = vmatmul.f32.gmra.mxu0 %v255
    %v283 = vpop.f32.mrf.mxu0
    %v284 = vadd.f32 0.0, %v283
    %285 = vmatmul.f32.gmra.mxu0 %v258
    %v286 = vpop.f32.mrf.mxu0
    %v287 = vadd.f32 0.0, %v286
    %288 = vdwg.mxu0
    %vm289 = vcmask 130048
    %v290 = vsel %vm289, %v278, 0.0
    %v291 = vsel %vm289, %v281, 0.0
    %v292 = vadd.f32 %v290, %v291
    %v293 = vsel %vm289, %v284, 0.0
    %v294 = vadd.f32 %v292, %v293
    %v295 = vsel %vm289, %v287, 0.0
    %v296 = vadd.f32 %v294, %v295
    %v297 = vrot.slane %v296, 4
    %v298 = vadd.f32 %v296, %v297
    %v299 = vrot.slane %v298, 2
    %v300 = vadd.f32 %v298, %v299
    %v301 = vrot.slane %v300, 1
    %v302 = vadd.f32 %v300, %v301
    %v303 = vrcp.pop 32.0
    %v304 = vmul.f32 32.0, %v303
    %v305 = vsub.f32 1.0, %v304
    %v306 = vmul.f32 %v303, %v305
    %v307 = vadd.f32 %v303, %v306
    %vm308 = vweird.f32 %v303
    %v309 = vsel %vm308, %v303, %v307
    %v310 = vmul.f32 %v302, %v309
    %v311 = vsub.f32 %v278, %v310
    %v312 = vsub.f32 %v281, %v310
    %v313 = vsub.f32 %v284, %v310
    %v314 = vsub.f32 %v287, %v310
    %v315 = vmul.f32 %v311, %v311
    %v316 = vmul.f32 %v312, %v312
    %v317 = vmul.f32 %v313, %v313
    %v318 = vmul.f32 %v314, %v314
    %v319 = vsel %vm289, %v315, 0.0
    %v320 = vsel %vm289, %v316, 0.0
    %v321 = vadd.f32 %v319, %v320
    %v322 = vsel %vm289, %v317, 0.0
    %v323 = vadd.f32 %v321, %v322
    %v324 = vsel %vm289, %v318, 0.0
    %v325 = vadd.f32 %v323, %v324
    %v326 = vrot.slane %v325, 4
    %v327 = vadd.f32 %v325, %v326
    %v328 = vrot.slane %v327, 2
    %v329 = vadd.f32 %v327, %v328
    %v330 = vrot.slane %v329, 1
    %v331 = vadd.f32 %v329, %v330
    %v332 = vmul.f32 %v331, %v309
    %v333 = vadd.f32 %v332, 1e-05
    %v334 = vrsqrt.pop %v333
    %v335 = vmul.f32 %v334, %v333
    %v336 = vmul.f32 %v335, %v334
    %v337 = vmul.f32 0.5, %v336
    %v338 = vsub.f32 1.5, %v337
    %v339 = vmul.f32 %v334, %v338
    %vm340 = vweird.f32 %v333
    %vm341 = vweird.f32 %v334
    %vm342 = vmor %vm340, %vm341
    %v343 = vsel %vm342, %v334, %v339
    %v344 = vmul.f32 %v311, %v343
    %v345 = vmul.f32 %v312, %v343
    %v346 = vmul.f32 %v313, %v343
    %v347 = vmul.f32 %v314, %v343
    %v348 = vsel %vm289, %v344, -inf
    %349 = vmax.xlane.f32.xlu0 %v348
    %v350 = vpop.xlane.xlu0 %349
    %v351 = vsel %vm289, %v345, -inf
    %352 = vmax.xlane.f32.xlu0 %v351
    %v353 = vpop.xlane.xlu0 %352
    %v354 = vsel %vm289, %v346, -inf
    %355 = vmax.xlane.f32.xlu0 %v354
    %v356 = vpop.xlane.xlu0 %355
    %v357 = vsel %vm289, %v347, -inf
    %358 = vmax.xlane.f32.xlu0 %v357
    %v359 = vpop.xlane.xlu0 %358
    %v360 = vsub.f32 %v344, %v350
    %v361 = vsub.f32 %v345, %v353
    %v362 = vsub.f32 %v346, %v356
    %v363 = vsub.f32 %v347, %v359
    %v364 = vmul.f32 %v360, 1.442695
    %v365 = vpow.pop %v364
    %v366 = vmul.f32 %v361, 1.442695
    %v367 = vpow.pop %v366
    %v368 = vmul.f32 %v362, 1.442695
    %v369 = vpow.pop %v368
    %v370 = vmul.f32 %v363, 1.442695
    %v371 = vpow.pop %v370
    %v372 = vsel %vm289, %v365, 0.0
    %373 = vadd.xlane.f32.xlu0 %v372
    %v374 = vpop.xlane.xlu0 %373
    %v375 = vsel %vm289, %v367, 0.0
    %376 = vadd.xlane.f32.xlu0 %v375
    %v377 = vpop.xlane.xlu0 %376
    %v378 = vsel %vm289, %v369, 0.0
    %379 = vadd.xlane.f32.xlu0 %v378
    %v380 = vpop.xlane.xlu0 %379
    %v381 = vsel %vm289, %v371, 0.0
    %382 = vadd.xlane.f32.xlu0 %v381
    %v383 = vpop.xlane.xlu0 %382
    %v384 = vrcp.pop %v374
    %v385 = vmul.f32 %v374, %v384
    %v386 = vsub.f32 1.0, %v385
    %v387 = vmul.f32 %v384, %v386
    %v388 = vadd.f32 %v384, %v387
    %vm389 = vweird.f32 %v374
    %vm390 = vweird.f32 %v384
    %vm391 = vmor %vm389, %vm390
    %v392 = vsel %vm391, %v384, %v388
    %v393 = vand.u32 2147483647, %v374
    %vm394 = vcmp.eq.f32.partialorder %v393, 8.507059e+37
    %v395 = vand.u32 %v374, 2147483648
    %v396 = vor.u32 1.1754944e-38, %v395
    %v397 = vsel %vm394, %v396, %v392
    %v398 = vmul.f32 %v365, %v397
    %v399 = vrcp.pop %v377
    %v400 = vmul.f32 %v377, %v399
    %v401 = vsub.f32 1.0, %v400
    %v402 = vmul.f32 %v399, %v401
    %v403 = vadd.f32 %v399, %v402
    %vm404 = vweird.f32 %v377
    %vm405 = vweird.f32 %v399
    %vm406 = vmor %vm404, %vm405
    %v407 = vsel %vm406, %v399, %v403
    %v408 = vand.u32 2147483647, %v377
    %vm409 = vcmp.eq.f32.partialorder %v408, 8.507059e+37
    %v410 = vand.u32 %v377, 2147483648
    %v411 = vor.u32 1.1754944e-38, %v410
    %v412 = vsel %vm409, %v411, %v407
    %v413 = vmul.f32 %v367, %v412
    %v414 = vrcp.pop %v380
    %v415 = vmul.f32 %v380, %v414
    %v416 = vsub.f32 1.0, %v415
    %v417 = vmul.f32 %v414, %v416
    %v418 = vadd.f32 %v414, %v417
    %vm419 = vweird.f32 %v380
    %vm420 = vweird.f32 %v414
    %vm421 = vmor %vm419, %vm420
    %v422 = vsel %vm421, %v414, %v418
    %v423 = vand.u32 2147483647, %v380
    %vm424 = vcmp.eq.f32.partialorder %v423, 8.507059e+37
    %v425 = vand.u32 %v380, 2147483648
    %v426 = vor.u32 1.1754944e-38, %v425
    %v427 = vsel %vm424, %v426, %v422
    %v428 = vmul.f32 %v369, %v427
    %v429 = vrcp.pop %v383
    %v430 = vmul.f32 %v383, %v429
    %v431 = vsub.f32 1.0, %v430
    %v432 = vmul.f32 %v429, %v431
    %v433 = vadd.f32 %v429, %v432
    %vm434 = vweird.f32 %v383
    %vm435 = vweird.f32 %v429
    %vm436 = vmor %vm434, %vm435
    %v437 = vsel %vm436, %v429, %v433
    %v438 = vand.u32 2147483647, %v383
    %vm439 = vcmp.eq.f32.partialorder %v438, 8.507059e+37
    %v440 = vand.u32 %v383, 2147483648
    %v441 = vor.u32 1.1754944e-38, %v440
    %v442 = vsel %vm439, %v441, %v437
    %v443 = vmul.f32 %v371, %v442
    %444 = vst.msk [vmem:[#allocation2] sm:$0xff] %vm289, %v398
    %445 = vst.msk [vmem:[#allocation2 + $0x8] sm:$0xff] %vm289, %v413
    %446 = vst.msk [vmem:[#allocation2 + $0x10] sm:$0xff] %vm289, %v428
    %447 = vst.msk [vmem:[#allocation2 + $0x18] sm:$0xff] %vm289, %v443
    // Predicated region
    $region22: #{tatt_1_forward.1} parent=1 // pred_check
      _
    $region23: #{tatt_1_forward.1} parent=1 // pred_check_branch
      %449 = sbr.rel (0) target = $region25
    $region24: #{tatt_1_forward.1} parent=1 // pred_region
      %451 = vsyncadd [#allocation3], 0
      %s452 = sshll.u32 [#allocation2], 4
      %s453 = int_to_ptr.vmem [resolvable:$true] %s452
      %s454 = sshll.u32 %s5, 4
      %s455 = int_to_ptr.hbm [resolvable:$true] %s454
      %460 = dma.vmem_to_hbm [thread:$0]  %s453, 512, %s455, [#allocation3], 128, 128, 8
    $region25: #{tatt_1_forward.1} parent=1 // pred_fallthru
      _
    // Predicated region
    $region26: #{tatt_1_forward.1} parent=1 // pred_check
      _
    $region27: #{tatt_1_forward.1} parent=1 // pred_check_branch
      %462 = sbr.rel (0) target = $region29
    $region28: #{tatt_1_forward.1} parent=1 // pred_region
      %464 = dma.done [#allocation3], 512
    $region29: #{tatt_1_forward.1} parent=1 // pred_fallthru
      _
    %465 = vsyncpa [#allocation3], 1

</llo_original>
